<compile_context>
chip_gen: v6e
topology: v6e:2x2x1
jax: 0.10.0
libtpu: 0.0.40
codegen_flags: <defaults>
</compile_context>

<pallas_src>
import jax
import jax.numpy as jnp
from jax import lax
from jax.experimental import pallas as pl
from jax.experimental.pallas import tpu as pltpu


def edge_mlp_kernel(x_ref, w0T_ref, w1T_ref, o_ref):
    # x_ref  : (T, F)   f32  -- native row-major tile of the flattened (B*E, F) input
    # w0T_ref: (L0, F)  f32  -- first layer weights, transposed (tiny, resident)
    # w1T_ref: (L1, L0) f32  -- second layer weights, transposed (tiny, resident)
    # o_ref  : (L1, T)  f32  -- rows in the lane dim -> lane-dense stores
    #
    # h = W0^T @ X^T, expressed as a dot_general contracting the feature axis of
    # both operands (the MXU consumes the rhs transposed); the long row axis T
    # stays in the lane dim so all downstream VPU/EUP work is lane-dense.
    h = lax.dot_general(
        w0T_ref[...], x_ref[...],
        dimension_numbers=(((1,), (1,)), ((), ())),
        preferred_element_type=jnp.float32)                 # (L0, T)
    h = jnp.tanh(h)                                         # f32, EUP
    h = jnp.dot(w1T_ref[...], h,
                preferred_element_type=jnp.float32)         # (L1, T)
    # sigmoid(h) = 1 / (1 + exp(-h)); approx reciprocal rides the EUP slot
    # (rel. error ~2^-12, well inside tolerance) instead of VALU divide work.
    o_ref[...] = pl.reciprocal(1.0 + jnp.exp(-h), approx=True)


def _round_up(n, m):
    return ((n + m - 1) // m) * m


def edge_mlp_forward(x, w0, w1, *, max_lane_tile=32768):
    """edge_mlp forward. x: (B, E, F) f32, w0: (F, L0), w1: (L0, L1)."""
    B, E, F = x.shape
    L0 = w0.shape[1]
    L1 = w1.shape[1]
    N = B * E

    x2d = x.reshape(N, F)        # free row-major flatten; fed to the kernel as-is (f32)
    w0T = jnp.transpose(w0)      # (L0, F)  -- tiny
    w1T = jnp.transpose(w1)      # (L1, L0) -- tiny

    if N <= 4096:
        # Small problem: a single block covering the whole row axis.  Block dims
        # equal the full array dims, so no (8,128) divisibility constraint and
        # no padding is needed.
        T = N
    else:
        # Large lane tile: multiple of 256 (divisible by 8 for the x sublane dim
        # and by 128 for the lane-dense output dim), capped so VMEM stays well
        # under v7x's budget, and sized so the grid has >= 8 steps (both v7x
        # TensorCores get work, per-step overhead is amortized).  The ragged
        # last block is safe: garbage rows beyond N are per-column independent
        # and the output store is masked — do not "fix" by padding.
        T = min(max_lane_tile, max(256, _round_up(pl.cdiv(N, 8), 256)))
    grid = (pl.cdiv(N, T),)

    cost = pl.CostEstimate(
        flops=2 * N * (F * L0 + L0 * L1),
        transcendentals=N * (L0 + L1),
        bytes_accessed=(N * F + N * L1 + F * L0 + L0 * L1) * 4,
    )

    outT = pl.pallas_call(
        edge_mlp_kernel,
        out_shape=jax.ShapeDtypeStruct((L1, N), jnp.float32),
        grid_spec=pl.GridSpec(
            grid=grid,
            in_specs=[
                pl.BlockSpec((T, F), lambda i: (i, 0)),    # streamed row tile (native layout)
                pl.BlockSpec((L0, F), lambda i: (0, 0)),   # weights fully resident
                pl.BlockSpec((L1, L0), lambda i: (0, 0)),
            ],
            out_specs=pl.BlockSpec((L1, T), lambda i: (0, i)),  # lane-dense output tile
        ),
        compiler_params=pltpu.CompilerParams(
            dimension_semantics=("parallel",),
            vmem_limit_bytes=48 * 1024 * 1024,   # > v5e/v6e/v7x default scoped, < v7x physical
        ),
        cost_estimate=cost,
    )(x2d, w0T, w1T)

    out = jnp.transpose(outT).reshape(B, E, L1)
    # torch.squeeze at the end of forward removes ALL size-1 dims (parity).
    return jnp.squeeze(out)


def xavier_uniform(key, fan_in, fan_out, dtype=jnp.float32):
    bound = jnp.sqrt(6.0 / (fan_in + fan_out))
    return jax.random.uniform(key, (fan_in, fan_out), dtype=dtype,
                              minval=-bound, maxval=bound)


def _reference(x, w0, w1):
    h = jnp.tanh(x @ w0)
    h = 1.0 / (1.0 + jnp.exp(-(h @ w1)))
    return jnp.squeeze(h)


if __name__ == "__main__":
    # Module config: input feature size = 32, layers = [8, 4]
    IN_FEAT = 32
    LAYERS = [8, 4]

    key = jax.random.PRNGKey(0)
    kx, k0, k1, kx2 = jax.random.split(key, 4)

    w0 = xavier_uniform(k0, IN_FEAT, LAYERS[0])
    w1 = xavier_uniform(k1, LAYERS[0], LAYERS[1])

    # --- Test 1: small 3-D input (single-block path) ---
    B, E = 2, 8
    x = jax.random.normal(kx, (B, E, IN_FEAT), dtype=jnp.float32)
    out = jax.block_until_ready(edge_mlp_forward(x, w0, w1))
    ref = _reference(x, w0, w1)
    assert out.shape == ref.shape, (out.shape, ref.shape)
    assert jnp.allclose(out, ref, atol=2e-3, rtol=2e-3), \
        float(jnp.max(jnp.abs(out - ref)))

    # --- Test 2: larger row count -> multi-step grid with a ragged last block ---
    B2, E2 = 2, 4100   # N = 8200 (not a multiple of the tile) exercises masked edge stores
    x2 = jax.random.normal(kx2, (B2, E2, IN_FEAT), dtype=jnp.float32)
    out2 = jax.block_until_ready(edge_mlp_forward(x2, w0, w1))
    ref2 = _reference(x2, w0, w1)
    assert out2.shape == ref2.shape, (out2.shape, ref2.shape)
    assert jnp.allclose(out2, ref2, atol=2e-3, rtol=2e-3), \
        float(jnp.max(jnp.abs(out2 - ref2)))

    print("KERNEL_OK")
</pallas_src>

<mosaic_0001>
module attributes {stable_mosaic.version = 11 : i64} {
  func.func @edge_mlp_kernel(%arg0: i32, %arg1: memref<16x32xf32, #tpu.memory_space<vmem>>, %arg2: memref<8x32xf32, #tpu.memory_space<vmem>>, %arg3: memref<4x8xf32, #tpu.memory_space<vmem>>, %arg4: memref<4x16xf32, #tpu.memory_space<vmem>>) attributes {dimension_semantics = [#tpu.dimension_semantics<parallel>], iteration_bounds = array<i64: 1>, scalar_prefetch = 0 : i64, scratch_operands = 0 : i64, tpu.core_type = #tpu.core_type<tc>, window_params = [{transform_indices = @transform_0, window_bounds = array<i64: 16, 32>}, {pipeline_mode = #tpu.pipeline_mode<synchronous>, transform_indices = @transform_1, window_bounds = array<i64: 8, 32>}, {pipeline_mode = #tpu.pipeline_mode<synchronous>, transform_indices = @transform_2, window_bounds = array<i64: 4, 8>}, {transform_indices = @transform_3, window_bounds = array<i64: 4, 16>}]} {
    %c0 = arith.constant 0 : index
    %c0_0 = arith.constant 0 : index
    %0 = vector.load %arg2[%c0, %c0_0] : memref<8x32xf32, #tpu.memory_space<vmem>>, vector<8x32xf32>
    %c0_1 = arith.constant 0 : index
    %c0_2 = arith.constant 0 : index
    %1 = vector.load %arg1[%c0_1, %c0_2] : memref<16x32xf32, #tpu.memory_space<vmem>>, vector<16x32xf32>
    %cst = arith.constant dense<0.000000e+00> : vector<8x16xf32>
    %2 = tpu.matmul %0, %1, %cst {dimension_numbers = #tpu.dot_dimension_numbers<[1], [1], [0], [0], [0, 0, 1, 0], [], []>} : vector<8x32xf32>, vector<16x32xf32>, vector<8x16xf32> -> vector<8x16xf32>
    %3 = math.tanh %2 : vector<8x16xf32>
    %c0_3 = arith.constant 0 : index
    %c0_4 = arith.constant 0 : index
    %4 = vector.load %arg3[%c0_3, %c0_4] : memref<4x8xf32, #tpu.memory_space<vmem>>, vector<4x8xf32>
    %cst_5 = arith.constant dense<0.000000e+00> : vector<4x16xf32>
    %5 = tpu.matmul %4, %3, %cst_5 {dimension_numbers = #tpu.dot_dimension_numbers<[1], [0], [0], [1], [0, 0, 1, 1], [], []>} : vector<4x8xf32>, vector<8x16xf32>, vector<4x16xf32> -> vector<4x16xf32>
    %cst_6 = arith.constant 0.000000e+00 : f32
    %6 = vector.broadcast %cst_6 : f32 to vector<4x16xf32>
    %7 = arith.subf %6, %5 : vector<4x16xf32>
    %8 = math.exp %7 : vector<4x16xf32>
    %cst_7 = arith.constant 1.000000e+00 : f32
    %9 = vector.broadcast %cst_7 : f32 to vector<4x16xf32>
    %10 = arith.addf %9, %8 : vector<4x16xf32>
    %11 = tpu.reciprocal %10 {approx = true} : vector<4x16xf32> -> vector<4x16xf32>
    %c0_8 = arith.constant 0 : index
    %c0_9 = arith.constant 0 : index
    %12 = vector.load %arg4[%c0_8, %c0_9] : memref<4x16xf32, #tpu.memory_space<vmem>>, vector<4x16xf32>
    tpu.vector_store %arg4[%c0_8, %c0_9], %11 {strides = array<i32>} : memref<4x16xf32, #tpu.memory_space<vmem>>, vector<4x16xf32>,
    return
  }
  func.func @transform_0(%arg0: i32) -> (i32, i32) {
    %c0_i32 = arith.constant 0 : i32
    %c0_i32_0 = arith.constant 0 : i32
    return %arg0, %c0_i32 : i32, i32
  }
  func.func @transform_1(%arg0: i32) -> (i32, i32) {
    %c0_i32 = arith.constant 0 : i32
    %c0_i32_0 = arith.constant 0 : i32
    %c0_i32_1 = arith.constant 0 : i32
    return %c0_i32, %c0_i32_0 : i32, i32
  }
  func.func @transform_2(%arg0: i32) -> (i32, i32) {
    %c0_i32 = arith.constant 0 : i32
    %c0_i32_0 = arith.constant 0 : i32
    %c0_i32_1 = arith.constant 0 : i32
    return %c0_i32, %c0_i32_0 : i32, i32
  }
  func.func @transform_3(%arg0: i32) -> (i32, i32) {
    %c0_i32 = arith.constant 0 : i32
    %c0_i32_0 = arith.constant 0 : i32
    return %c0_i32, %arg0 : i32, i32
  }
}

</mosaic_0001>

<llo_original>
// kernel: tpu_custom_call.1
$region0: #{tpu_custom_call.1}
  #allocation0 [shape = 'u32[]', space=smem, size = 0x4, offset = 0x4, fixed_abs, tag = 'smem constant byte address 0x4 - core index']
  #allocation1 [shape = 'u32[144,128]{1,0:T(1,128)}', space=vmem, size = 0x12000, scoped, tag = 'internal scratch']
  %s0 = inlined_call_operand.hbm [shape: f32[16,32], index: 0, kind: input, shape index: {}]
  %s1 = inlined_call_operand.hbm [shape: f32[8,32], index: 1, kind: input, shape index: {}]
  %s2 = inlined_call_operand.hbm [shape: f32[4,8], index: 2, kind: input, shape index: {}]
  %s3 = inlined_call_operand.hbm [shape: f32[4,16], index: 3, kind: output, shape index: {}]
  %s4 = sld [smem:[#allocation0]]
  $region34: #{tpu_custom_call.1} parent=0
    _
  %s6 = ssub.s32 1, %s4
  %s7 = scalar_select 0, %s6, %s4
  $region1: #{tpu_custom_call.1} parent=0
    #allocation2 [shape = 'u8[8192]{0}', space=vmem, size = 0x2000, scoped, tag = 'input window, operand 0, single buffered']
    #allocation3 [shape = 's32[1]{0}', space=sflag, size = 0x4, scoped, tag = 'scoped memory for tpu_custom_call.1']
    #allocation4 [shape = 's32[1]{0}', space=sflag, size = 0x4, scoped, tag = 'scoped memory for tpu_custom_call.1']
    #allocation5 [shape = 'u8[4096]{0}', space=vmem, size = 0x1000, scoped, tag = 'input window, operand 1, single buffered']
    #allocation6 [shape = 's32[1]{0}', space=sflag, size = 0x4, scoped, tag = 'scoped memory for tpu_custom_call.1']
    #allocation7 [shape = 'u8[2048]{0}', space=vmem, size = 0x800, scoped, tag = 'input window, operand 2, single buffered']
    #allocation8 [shape = 'u8[2048]{0}', space=vmem, size = 0x800, scoped, tag = 'output window, operand 0, single buffered']
    %8 = vsyncpa [#allocation3], 0
    %9 = vsyncpa [#allocation6], 0
    %10 = vsyncpa [#allocation4], 0
    // Predicated region
    $region2: #{tpu_custom_call.1} parent=1 // pred_check
      _
    $region3: #{tpu_custom_call.1} parent=1 // pred_check_branch
      %12 = sbr.rel (0) target = $region5
    $region4: #{tpu_custom_call.1} parent=1 // pred_region
      %s14 = ssub.s32 256, 256
      %15 = vsyncadd [#allocation3], %s14
      %s16 = sshll.u32 [#allocation2], 4
      %s17 = int_to_ptr.vmem [resolvable:$true] %s16
      %22 = dma.hbm_to_vmem [thread:$0]  %s0, 256, %s17, [#allocation3], 128, 128, 8
    $region5: #{tpu_custom_call.1} parent=1 // pred_fallthru
      _
    // Predicated region
    $region6: #{tpu_custom_call.1} parent=1 // pred_check
      _
    $region7: #{tpu_custom_call.1} parent=1 // pred_check_branch
      %24 = sbr.rel (0) target = $region9
    $region8: #{tpu_custom_call.1} parent=1 // pred_region
      %s26 = ssub.s32 128, 128
      %27 = vsyncadd [#allocation6], %s26
      %s29 = sshll.u32 [#allocation5], 4
      %s30 = int_to_ptr.vmem [resolvable:$true] %s29
      %32 = dma.hbm_to_vmem [thread:$0]  %s1, 128, %s30, [#allocation6]
    $region9: #{tpu_custom_call.1} parent=1 // pred_fallthru
      _
    // Predicated region
    $region10: #{tpu_custom_call.1} parent=1 // pred_check
      _
    $region11: #{tpu_custom_call.1} parent=1 // pred_check_branch
      %34 = sbr.rel (0) target = $region13
    $region12: #{tpu_custom_call.1} parent=1 // pred_region
      %s36 = ssub.s32 64, 64
      %37 = vsyncadd [#allocation6], %s36
      %s39 = sshll.u32 [#allocation7], 4
      %s40 = int_to_ptr.vmem [resolvable:$true] %s39
      %42 = dma.hbm_to_vmem [thread:$0]  %s2, 64, %s40, [#allocation6]
    $region13: #{tpu_custom_call.1} parent=1 // pred_fallthru
      _
    // Predicated region
    $region14: #{tpu_custom_call.1} parent=1 // pred_check
      _
    $region15: #{tpu_custom_call.1} parent=1 // pred_check_branch
      %44 = sbr.rel (0) target = $region17
    $region16: #{tpu_custom_call.1} parent=1 // pred_region
      %45 = dma.done [#allocation3], 256
    $region17: #{tpu_custom_call.1} parent=1 // pred_fallthru
      _
    // Predicated region
    $region18: #{tpu_custom_call.1} parent=1 // pred_check
      _
    $region19: #{tpu_custom_call.1} parent=1 // pred_check_branch
      %47 = sbr.rel (0) target = $region21
    $region20: #{tpu_custom_call.1} parent=1 // pred_region
      %48 = dma.done [#allocation6], 128
    $region21: #{tpu_custom_call.1} parent=1 // pred_fallthru
      _
    // Predicated region
    $region22: #{tpu_custom_call.1} parent=1 // pred_check
      _
    $region23: #{tpu_custom_call.1} parent=1 // pred_check_branch
      %50 = sbr.rel (0) target = $region25
    $region24: #{tpu_custom_call.1} parent=1 // pred_region
      %51 = dma.done [#allocation6], 64
    $region25: #{tpu_custom_call.1} parent=1 // pred_fallthru
      _
    %v52 = vld [vmem:[#allocation5] sm:$0xff]
    %v53 = vld [vmem:[#allocation2] sm:$0xff]
    %v54 = vld [vmem:[#allocation2 + $0x8] sm:$0xff]
    %vm55 = vcmask 261120
    %v57 = vsel %vm55, %v52, 0
    %v60 = vsel %vm55, %v53, 0
    %v63 = vsel %vm55, %v54, 0
    %65 = vmatprep.subr.mxu0 0.0
    %66 = vmatpush1.xpose.msra.mxu0 0.0
    %67 = vmatprep.subr.mxu0 0.0
    %68 = vmatpush1.xpose.msra.mxu0 0.0
    %69 = vmatprep.subr.mxu0 0.0
    %70 = vmatpush1.xpose.msra.mxu0 0.0
    %71 = vmatprep.subr.mxu0 0.0
    %72 = vmatpush1.xpose.msra.mxu0 0.0
    %73 = vmatprep.subr.mxu0 0.0
    %74 = vmatpush1.xpose.msra.mxu0 0.0
    %75 = vmatprep.subr.mxu0 0.0
    %76 = vmatpush1.xpose.msra.mxu0 0.0
    %77 = vmatprep.subr.mxu0 0.0
    %78 = vmatpush1.xpose.msra.mxu0 0.0
    %79 = vmatprep.subr.mxu0 0.0
    %80 = vmatpush1.xpose.msra.mxu0 0.0
    %81 = vmatprep.subr.mxu0 0.0
    %82 = vmatpush1.xpose.msra.mxu0 0.0
    %83 = vmatprep.subr.mxu0 0.0
    %84 = vmatpush1.xpose.msra.mxu0 0.0
    %85 = vmatprep.subr.mxu0 0.0
    %86 = vmatpush1.xpose.msra.mxu0 0.0
    %87 = vmatprep.subr.mxu0 0.0
    %88 = vmatpush1.xpose.msra.mxu0 0.0
    %89 = vmatprep.subr.mxu0 0.0
    %90 = vmatpush1.xpose.msra.mxu0 0.0
    %91 = vmatprep.subr.mxu0 0.0
    %92 = vmatpush1.xpose.msra.mxu0 0.0
    %93 = vmatprep.subr.mxu0 0.0
    %94 = vmatpush1.xpose.msra.mxu0 %v63
    %95 = vmatprep.subr.mxu0 0.0
    %96 = vmatpush1.xpose.msra.mxu0 %v60
    %97 = vmatprep.subr.mxu0 0.0
    %98 = vmatpush2.xpose.msra.mxu0 0.0
    %99 = vmatprep.subr.mxu0 0.0
    %100 = vmatpush2.xpose.msra.mxu0 0.0
    %101 = vmatprep.subr.mxu0 0.0
    %102 = vmatpush2.xpose.msra.mxu0 0.0
    %103 = vmatprep.subr.mxu0 0.0
    %104 = vmatpush2.xpose.msra.mxu0 0.0
    %105 = vmatprep.subr.mxu0 0.0
    %106 = vmatpush2.xpose.msra.mxu0 0.0
    %107 = vmatprep.subr.mxu0 0.0
    %108 = vmatpush2.xpose.msra.mxu0 0.0
    %109 = vmatprep.subr.mxu0 0.0
    %110 = vmatpush2.xpose.msra.mxu0 0.0
    %111 = vmatprep.subr.mxu0 0.0
    %112 = vmatpush2.xpose.msra.mxu0 0.0
    %113 = vmatprep.subr.mxu0 0.0
    %114 = vmatpush2.xpose.msra.mxu0 0.0
    %115 = vmatprep.subr.mxu0 0.0
    %116 = vmatpush2.xpose.msra.mxu0 0.0
    %117 = vmatprep.subr.mxu0 0.0
    %118 = vmatpush2.xpose.msra.mxu0 0.0
    %119 = vmatprep.subr.mxu0 0.0
    %120 = vmatpush2.xpose.msra.mxu0 0.0
    %121 = vmatprep.subr.mxu0 0.0
    %122 = vmatpush2.xpose.msra.mxu0 0.0
    %123 = vmatprep.subr.mxu0 0.0
    %124 = vmatpush2.xpose.msra.mxu0 0.0
    %125 = vmatprep.subr.mxu0 0.0
    %126 = vmatpush2.xpose.msra.mxu0 0.0
    %127 = vmatprep.subr.mxu0 0.0
    %128 = vmatpush2.xpose.msra.mxu0 0.0
    %129 = vmatprep.mubr.f32.mxu0 0.0
    %130 = vmatmul.mubr.f32.gmra.mxu0 %v57
    %v131 = vpop.f32.mrf.mxu0
    %v132 = vadd.f32 0.0, %v131
    %v133 = vpop.f32.mrf.mxu0
    %134 = vdwg.mxu0
    %v135 = vtanh.pop %v132
    %v136 = vld [vmem:[#allocation7] sm:$0xf]
    %vm137 = vcmask 64512
    %v139 = vsel %vm137, %v136, 0
    %141 = vmatprep.subr.mxu0 0.0
    %142 = vmatpush1.msra.mxu0 0.0
    %143 = vmatprep.subr.mxu0 0.0
    %144 = vmatpush1.msra.mxu0 0.0
    %145 = vmatprep.subr.mxu0 0.0
    %146 = vmatpush1.msra.mxu0 0.0
    %147 = vmatprep.subr.mxu0 0.0
    %148 = vmatpush1.msra.mxu0 0.0
    %149 = vmatprep.subr.mxu0 0.0
    %150 = vmatpush1.msra.mxu0 0.0
    %151 = vmatprep.subr.mxu0 0.0
    %152 = vmatpush1.msra.mxu0 0.0
    %153 = vmatprep.subr.mxu0 0.0
    %154 = vmatpush1.msra.mxu0 0.0
    %155 = vmatprep.subr.mxu0 0.0
    %156 = vmatpush1.msra.mxu0 0.0
    %157 = vmatprep.subr.mxu0 0.0
    %158 = vmatpush1.msra.mxu0 0.0
    %159 = vmatprep.subr.mxu0 0.0
    %160 = vmatpush1.msra.mxu0 0.0
    %161 = vmatprep.subr.mxu0 0.0
    %162 = vmatpush1.msra.mxu0 0.0
    %163 = vmatprep.subr.mxu0 0.0
    %164 = vmatpush1.msra.mxu0 0.0
    %165 = vmatprep.subr.mxu0 0.0
    %166 = vmatpush1.msra.mxu0 0.0
    %167 = vmatprep.subr.mxu0 0.0
    %168 = vmatpush1.msra.mxu0 0.0
    %169 = vmatprep.subr.mxu0 0.0
    %170 = vmatpush1.msra.mxu0 0.0
    %171 = vmatprep.subr.mxu0 0.0
    %172 = vmatpush1.msra.mxu0 %v135
    %173 = vmatprep.subr.mxu0 0.0
    %174 = vmatpush2.msra.mxu0 0.0
    %175 = vmatprep.subr.mxu0 0.0
    %176 = vmatpush2.msra.mxu0 0.0
    %177 = vmatprep.subr.mxu0 0.0
    %178 = vmatpush2.msra.mxu0 0.0
    %179 = vmatprep.subr.mxu0 0.0
    %180 = vmatpush2.msra.mxu0 0.0
    %181 = vmatprep.subr.mxu0 0.0
    %182 = vmatpush2.msra.mxu0 0.0
    %183 = vmatprep.subr.mxu0 0.0
    %184 = vmatpush2.msra.mxu0 0.0
    %185 = vmatprep.subr.mxu0 0.0
    %186 = vmatpush2.msra.mxu0 0.0
    %187 = vmatprep.subr.mxu0 0.0
    %188 = vmatpush2.msra.mxu0 0.0
    %189 = vmatprep.subr.mxu0 0.0
    %190 = vmatpush2.msra.mxu0 0.0
    %191 = vmatprep.subr.mxu0 0.0
    %192 = vmatpush2.msra.mxu0 0.0
    %193 = vmatprep.subr.mxu0 0.0
    %194 = vmatpush2.msra.mxu0 0.0
    %195 = vmatprep.subr.mxu0 0.0
    %196 = vmatpush2.msra.mxu0 0.0
    %197 = vmatprep.subr.mxu0 0.0
    %198 = vmatpush2.msra.mxu0 0.0
    %199 = vmatprep.subr.mxu0 0.0
    %200 = vmatpush2.msra.mxu0 0.0
    %201 = vmatprep.subr.mxu0 0.0
    %202 = vmatpush2.msra.mxu0 0.0
    %203 = vmatprep.subr.mxu0 0.0
    %204 = vmatpush2.msra.mxu0 0.0
    %205 = vmatprep.mubr.f32.mxu0 0.0
    %206 = vmatmul.mubr.f32.gmra.mxu0 %v139
    %v207 = vpop.f32.mrf.mxu0
    %v208 = vadd.f32 0.0, %v207
    %v209 = vpop.f32.mrf.mxu0
    %210 = vdwg.mxu0
    %v211 = vsub.f32 0.0, %v208
    %v212 = vmul.f32 %v211, 1.442695
    %v213 = vpow.pop %v212
    %v214 = vadd.f32 %v213, 1.0
    %v215 = vrcp.pop %v214
    %vm216 = vcmask 125952
    %217 = vst.msk [vmem:[#allocation8] sm:$0xf] %vm216, %v215
    // Predicated region
    $region26: #{tpu_custom_call.1} parent=1 // pred_check
      _
    $region27: #{tpu_custom_call.1} parent=1 // pred_check_branch
      %219 = sbr.rel (0) target = $region29
    $region28: #{tpu_custom_call.1} parent=1 // pred_region
      %s221 = ssub.s32 64, 64
      %222 = vsyncadd [#allocation4], %s221
      %s224 = sshll.u32 [#allocation8], 4
      %s225 = int_to_ptr.vmem [resolvable:$true] %s224
      %227 = dma.vmem_to_hbm [thread:$0]  %s225, 64, %s3, [#allocation4]
    $region29: #{tpu_custom_call.1} parent=1 // pred_fallthru
      _
    // Predicated region
    $region30: #{tpu_custom_call.1} parent=1 // pred_check
      _
    $region31: #{tpu_custom_call.1} parent=1 // pred_check_branch
      %229 = sbr.rel (0) target = $region33
    $region32: #{tpu_custom_call.1} parent=1 // pred_region
      %230 = dma.done [#allocation4], 64
    $region33: #{tpu_custom_call.1} parent=1 // pred_fallthru
      _
    %231 = vsyncpa [#allocation3], 1
    %232 = vsyncpa [#allocation6], 1
    %233 = vsyncpa [#allocation4], 1

</llo_original>
